<compile_context>
chip_gen: v5e
topology: v5e:2x2
jax: 0.10.0
libtpu: 0.0.40
codegen_flags: <defaults>
</compile_context>

<pallas_src>
import jax
import jax.numpy as jnp
from jax.experimental import pallas as pl
from jax.experimental.pallas import tpu as pltpu


# -------------------------- Pallas kernel --------------------------------- #
def _prompt_assemble_kernel(prefix_ref, ctx_ref, suffix_ref, out_ref):
    """Assembles B classes' prompts [prefix | ctx | suffix] with one full-tile store.

    prefix_ref: (B, 1, D)           static slice of prefix rows for this block
    ctx_ref:    (n_ctx, D)          shared learned context (constant index_map ->
                                    DMA'd once, VMEM-resident across the grid)
    suffix_ref: (B, suffix_len, D)  static slice of suffix rows for this block
    out_ref:    (B, max_txt_len, D)
    """
    b = prefix_ref.shape[0]
    n_ctx, d = ctx_ref.shape
    ctx = jnp.broadcast_to(ctx_ref[...][None, :, :], (b, n_ctx, d))
    out_ref[...] = jnp.concatenate([prefix_ref[...], ctx, suffix_ref[...]], axis=1)


def assemble_prompts_pallas(prefix_sel, ctx_embds, suffix_sel, max_txt_len,
                            *, block_classes=64):
    """Returns ctx_token_embds of shape (n_sel, max_txt_len, 768).

    prefix_sel: (n_sel, 1, D)          already statically sliced to the split
    ctx_embds:  (n_ctx, D)
    suffix_sel: (n_sel, suffix_len, D) already statically sliced to the split
    """
    n_sel, _, d_emb = prefix_sel.shape
    n_ctx = ctx_embds.shape[0]
    suffix_len = suffix_sel.shape[1]
    assert 1 + n_ctx + suffix_len == max_txt_len
    # Robustness: the kernel copies all three inputs into one output buffer; require
    # a single common dtype rather than silently casting inside the kernel.
    assert prefix_sel.dtype == ctx_embds.dtype == suffix_sel.dtype, \
        "prefix/ctx/suffix embedding dtypes must match"

    # Batch up to `block_classes` classes per grid step.  Capped at 64 so the
    # double-buffered blocks stay well under v7x's 32 MiB scoped-VMEM default even
    # at max_txt_len=77 in f32.  For small n_sel this is a single grid step.
    b_cls = min(n_sel, block_classes)
    grid = (pl.cdiv(n_sel, b_cls),)
    # NOTE: if n_sel % b_cls != 0 the last block is partially out of bounds; this
    # kernel is a pure copy, so the OOB reads only feed OOB writes, which Pallas
    # drops — correctness is unaffected.

    grid_spec = pl.GridSpec(
        grid=grid,
        in_specs=[
            pl.BlockSpec((b_cls, 1, d_emb), lambda i: (i, 0, 0)),
            # learned ctx: constant index_map -> DMA'd once, stays VMEM-resident
            pl.BlockSpec((n_ctx, d_emb), lambda i: (0, 0)),
            pl.BlockSpec((b_cls, suffix_len, d_emb), lambda i: (i, 0, 0)),
        ],
        out_specs=pl.BlockSpec((b_cls, max_txt_len, d_emb), lambda i: (i, 0, 0)),
    )

    return pl.pallas_call(
        _prompt_assemble_kernel,
        out_shape=jax.ShapeDtypeStruct((n_sel, max_txt_len, d_emb), ctx_embds.dtype),
        grid_spec=grid_spec,
        compiler_params=pltpu.CompilerParams(
            dimension_semantics=("parallel",),   # shard class blocks across v7x's 2 TCs
        ),
    )(prefix_sel, ctx_embds, suffix_sel)


# -------------------------- Module (params + forward) --------------------- #
class PromptLearnerSingle:
    D_EMB = 768  # BERT embedding dim

    def __init__(self, key, *, n_context, num_base, num_novel, max_txt_len):
        self.n_ctx = n_context
        self.num_base = num_base
        self.num_novel = num_novel
        self.n_cls = num_base + num_novel + 1        # id 0 reserved (background)
        self.max_txt_len = max_txt_len
        self.suffix_len = max_txt_len - 1 - n_context
        assert self.suffix_len > 0

        ks = jax.random.split(key, 4)
        f32 = jnp.float32

        # TODO(synk): the real module builds prefix/suffix/mask from a BertTokenizerFast
        # + frozen BERT word-embedding table loaded from disk; deterministic random
        # stand-ins with identical shapes are used here instead.
        self.prefix_embds = jax.random.normal(ks[0], (self.n_cls, 1, self.D_EMB), f32)
        self.suffix_embds = jax.random.normal(
            ks[1], (self.n_cls, self.suffix_len, self.D_EMB), f32)
        self.token_mask = (jax.random.uniform(ks[2], (self.n_cls, max_txt_len)) > 0.3
                           ).astype(jnp.int32)

        # learnable context embeddings (std=0.02 normal init, as in the module)
        self.ctx_embds = 0.02 * jax.random.normal(ks[3], (n_context, self.D_EMB), f32)

        # TODO(synk): relpos2embd (the use_pos branch) is created in
        # setup_learnable_parameters() but never used in forward(), so it is omitted.

    # The class ids are always a contiguous static range -> represent as a slice.
    def specify_clsids_slice(self, split):
        if split == 'base':
            return 1, self.num_base + 1
        elif split == 'novel':
            return self.num_base + 1, self.num_base + self.num_novel + 1
        elif split == 'all':
            return 1, self.num_base + self.num_novel + 1
        raise AssertionError('split must be base, novel, or all')

    def specify_clsids_range(self, split):
        start, stop = self.specify_clsids_slice(split)
        return list(range(start, stop))

    def forward(self, split):
        start, stop = self.specify_clsids_slice(split.lower())

        # Static contiguous slices replace the data-dependent gather entirely.
        prefix_sel = self.prefix_embds[start:stop]
        suffix_sel = self.suffix_embds[start:stop]
        token_mask = self.token_mask[start:stop]

        # Fused broadcast + concat: the (n_sel, L, 768) tensor is written exactly
        # once by the kernel, in batched lane/sublane-dense tiles.
        ctx_token_embds = assemble_prompts_pallas(
            prefix_sel, self.ctx_embds, suffix_sel, self.max_txt_len)

        return ctx_token_embds, token_mask


# ------------------------------ main --------------------------------------- #
if __name__ == "__main__":
    key = jax.random.PRNGKey(0)
    model = PromptLearnerSingle(key, n_context=4, num_base=4, num_novel=3, max_txt_len=16)

    subj_tok, mask = model.forward('base')
    jax.block_until_ready((subj_tok, mask))

    # shape checks
    n_sel = model.num_base
    assert subj_tok.shape == (n_sel, model.max_txt_len, model.D_EMB)
    assert mask.shape == (n_sel, model.max_txt_len)

    # numerical check against the pure-JAX reference (gather + expand + concat)
    pids = jnp.asarray(model.specify_clsids_range('base'), dtype=jnp.int32)
    ref = jnp.concatenate(
        [model.prefix_embds[pids],
         jnp.broadcast_to(model.ctx_embds[None], (n_sel, model.n_ctx, model.D_EMB)),
         model.suffix_embds[pids]],
        axis=1)
    assert jnp.allclose(subj_tok, ref, atol=0.0, rtol=0.0)      # pure copies -> exact
    assert jnp.array_equal(mask, model.token_mask[pids])

    # exercise the 'novel' and 'all' splits too
    for split in ('novel', 'all'):
        tok_s, mask_s = model.forward(split)
        jax.block_until_ready((tok_s, mask_s))
        pids_s = jnp.asarray(model.specify_clsids_range(split), dtype=jnp.int32)
        ns = pids_s.shape[0]
        ref_s = jnp.concatenate(
            [model.prefix_embds[pids_s],
             jnp.broadcast_to(model.ctx_embds[None], (ns, model.n_ctx, model.D_EMB)),
             model.suffix_embds[pids_s]],
            axis=1)
        assert tok_s.shape == (ns, model.max_txt_len, model.D_EMB)
        assert mask_s.shape == (ns, model.max_txt_len)
        assert jnp.allclose(tok_s, ref_s, atol=0.0, rtol=0.0)
        assert jnp.array_equal(mask_s, model.token_mask[pids_s])

    print("KERNEL_OK")
</pallas_src>

<mosaic_0001>
module attributes {stable_mosaic.version = 11 : i64} {
  func.func @_prompt_assemble_kernel(%arg0: i32, %arg1: memref<4x1x768xf32, #tpu.memory_space<vmem>>, %arg2: memref<4x768xf32, #tpu.memory_space<vmem>>, %arg3: memref<4x11x768xf32, #tpu.memory_space<vmem>>, %arg4: memref<4x16x768xf32, #tpu.memory_space<vmem>>) attributes {dimension_semantics = [#tpu.dimension_semantics<parallel>], iteration_bounds = array<i64: 1>, scalar_prefetch = 0 : i64, scratch_operands = 0 : i64, tpu.core_type = #tpu.core_type<tc>, window_params = [{transform_indices = @transform_0, window_bounds = array<i64: 4, 1, 768>}, {pipeline_mode = #tpu.pipeline_mode<synchronous>, transform_indices = @transform_1, window_bounds = array<i64: 4, 768>}, {transform_indices = @transform_2, window_bounds = array<i64: 4, 11, 768>}, {transform_indices = @transform_3, window_bounds = array<i64: 4, 16, 768>}]} {
    %c0 = arith.constant 0 : index
    %c0_0 = arith.constant 0 : index
    %0 = vector.load %arg2[%c0, %c0_0] : memref<4x768xf32, #tpu.memory_space<vmem>>, vector<4x768xf32>
    %1 = vector.shape_cast %0 : vector<4x768xf32> to vector<1x4x768xf32>
    %2 = vector.shape_cast %1 : vector<1x4x768xf32> to vector<1x4x768xf32>
    %3 = vector.broadcast %2 : vector<1x4x768xf32> to vector<4x4x768xf32>
    %c0_1 = arith.constant 0 : index
    %c0_2 = arith.constant 0 : index
    %c0_3 = arith.constant 0 : index
    %4 = vector.load %arg1[%c0_1, %c0_2, %c0_3] : memref<4x1x768xf32, #tpu.memory_space<vmem>>, vector<4x1x768xf32>
    %c0_4 = arith.constant 0 : index
    %c0_5 = arith.constant 0 : index
    %c0_6 = arith.constant 0 : index
    %5 = vector.load %arg3[%c0_4, %c0_5, %c0_6] : memref<4x11x768xf32, #tpu.memory_space<vmem>>, vector<4x11x768xf32>
    %6 = tpu.concatenate %4, %3, %5 in 1 : vector<4x1x768xf32>, vector<4x4x768xf32>, vector<4x11x768xf32> -> vector<4x16x768xf32>
    %c0_7 = arith.constant 0 : index
    %c0_8 = arith.constant 0 : index
    %c0_9 = arith.constant 0 : index
    %7 = vector.load %arg4[%c0_7, %c0_8, %c0_9] : memref<4x16x768xf32, #tpu.memory_space<vmem>>, vector<4x16x768xf32>
    tpu.vector_store %arg4[%c0_7, %c0_8, %c0_9], %6 {strides = array<i32>} : memref<4x16x768xf32, #tpu.memory_space<vmem>>, vector<4x16x768xf32>,
    return
  }
  func.func @transform_0(%arg0: i32) -> (i32, i32, i32) {
    %c0_i32 = arith.constant 0 : i32
    %c0_i32_0 = arith.constant 0 : i32
    %c0_i32_1 = arith.constant 0 : i32
    return %arg0, %c0_i32, %c0_i32_0 : i32, i32, i32
  }
  func.func @transform_1(%arg0: i32) -> (i32, i32) {
    %c0_i32 = arith.constant 0 : i32
    %c0_i32_0 = arith.constant 0 : i32
    %c0_i32_1 = arith.constant 0 : i32
    return %c0_i32, %c0_i32_0 : i32, i32
  }
  func.func @transform_2(%arg0: i32) -> (i32, i32, i32) {
    %c0_i32 = arith.constant 0 : i32
    %c0_i32_0 = arith.constant 0 : i32
    %c0_i32_1 = arith.constant 0 : i32
    return %arg0, %c0_i32, %c0_i32_0 : i32, i32, i32
  }
  func.func @transform_3(%arg0: i32) -> (i32, i32, i32) {
    %c0_i32 = arith.constant 0 : i32
    %c0_i32_0 = arith.constant 0 : i32
    %c0_i32_1 = arith.constant 0 : i32
    return %arg0, %c0_i32, %c0_i32_0 : i32, i32, i32
  }
}

</mosaic_0001>

<llo_original>
// kernel: tpu_custom_call.1
$region0: #{tpu_custom_call.1}
  #allocation0 [shape = 'u32[]', space=smem, size = 0x4, offset = 0x4, fixed_abs, tag = 'smem constant byte address 0x4 - core index']
  #allocation1 [shape = 'u32[72,128]{1,0:T(1,128)}', space=vmem, size = 0x9000, scoped, tag = 'internal scratch']
  %s0 = inlined_call_operand.vmem [shape: f32[4,1,768], index: 0, kind: input, shape index: {}]
  %s1 = inlined_call_operand.vmem [shape: f32[4,768], index: 1, kind: input, shape index: {}]
  %s2 = inlined_call_operand.vmem [shape: f32[4,11,768], index: 2, kind: input, shape index: {}]
  %s3 = inlined_call_operand.hbm [shape: f32[4,16,768], index: 3, kind: output, shape index: {}]
  %s4 = sld [smem:[#allocation0]]
  $region22: #{tpu_custom_call.1} parent=0
    _
  %s6 = ssub.s32 1, %s4
  %s7 = scalar_select 0, %s6, %s4
  $region1: #{tpu_custom_call.1} parent=0
    #allocation2 [shape = 'u8[196608]{0}', space=vmem, size = 0x30000, scoped, tag = 'output window, operand 0, single buffered']
    #allocation3 [shape = 's32[1]{0}', space=sflag, size = 0x4, scoped, tag = 'scoped memory for tpu_custom_call.1']
    %8 = vsyncpa [#allocation3], 0
    // Predicated region
    $region2: #{tpu_custom_call.1} parent=1 // pred_check
      _
    $region3: #{tpu_custom_call.1} parent=1 // pred_check_branch
      %10 = sbr.rel (0) target = $region5
    $region4: #{tpu_custom_call.1} parent=1 // pred_region
      _
    $region5: #{tpu_custom_call.1} parent=1 // pred_fallthru
      _
    // Predicated region
    $region6: #{tpu_custom_call.1} parent=1 // pred_check
      _
    $region7: #{tpu_custom_call.1} parent=1 // pred_check_branch
      %12 = sbr.rel (0) target = $region9
    $region8: #{tpu_custom_call.1} parent=1 // pred_region
      _
    $region9: #{tpu_custom_call.1} parent=1 // pred_fallthru
      _
    // Predicated region
    $region10: #{tpu_custom_call.1} parent=1 // pred_check
      _
    $region11: #{tpu_custom_call.1} parent=1 // pred_check_branch
      %14 = sbr.rel (0) target = $region13
    $region12: #{tpu_custom_call.1} parent=1 // pred_region
      _
    $region13: #{tpu_custom_call.1} parent=1 // pred_fallthru
      _
    %v15 = vld [vmem:[%s1] sm:$0xff]
    %v16 = vld [vmem:[%s1 + $0x8] sm:$0xff]
    %v17 = vld [vmem:[%s1 + $0x10] sm:$0xff]
    %v18 = vld [vmem:[%s0] sm:$0x3f]
    %v19 = vld [vmem:[%s0 + $0x6] sm:$0x3f]
    %v20 = vld [vmem:[%s0 + $0xc] sm:$0x3f]
    %v21 = vld [vmem:[%s0 + $0x12] sm:$0x3f]
    %v22 = vld [vmem:[%s2] sm:$0xff]
    %v23 = vld [vmem:[%s2 + $0x8] sm:$0xff]
    %v24 = vld [vmem:[%s2 + $0x10] sm:$0xff]
    %v25 = vld [vmem:[%s2 + $0x18] sm:$0xff]
    %v26 = vld [vmem:[%s2 + $0x20] sm:$0xff]
    %v27 = vld [vmem:[%s2 + $0x28] sm:$0xff]
    %v28 = vld [vmem:[%s2 + $0x30] sm:$0x7]
    %v29 = vld [vmem:[%s2 + $0x38] sm:$0x7]
    %v30 = vld [vmem:[%s2 + $0x40] sm:$0x7]
    %v31 = vld [vmem:[%s2 + $0x48] sm:$0x7]
    %v32 = vld [vmem:[%s2 + $0x50] sm:$0x7]
    %v33 = vld [vmem:[%s2 + $0x58] sm:$0x7]
    %v34 = vld [vmem:[%s2 + $0x60] sm:$0xff]
    %v35 = vld [vmem:[%s2 + $0x68] sm:$0xff]
    %v36 = vld [vmem:[%s2 + $0x70] sm:$0xff]
    %v37 = vld [vmem:[%s2 + $0x78] sm:$0xff]
    %v38 = vld [vmem:[%s2 + $0x80] sm:$0xff]
    %v39 = vld [vmem:[%s2 + $0x88] sm:$0xff]
    %v40 = vld [vmem:[%s2 + $0x90] sm:$0x7]
    %v41 = vld [vmem:[%s2 + $0x98] sm:$0x7]
    %v42 = vld [vmem:[%s2 + $0xa0] sm:$0x7]
    %v43 = vld [vmem:[%s2 + $0xa8] sm:$0x7]
    %v44 = vld [vmem:[%s2 + $0xb0] sm:$0x7]
    %v45 = vld [vmem:[%s2 + $0xb8] sm:$0x7]
    %v46 = vld [vmem:[%s2 + $0xc0] sm:$0xff]
    %v47 = vld [vmem:[%s2 + $0xc8] sm:$0xff]
    %v48 = vld [vmem:[%s2 + $0xd0] sm:$0xff]
    %v49 = vld [vmem:[%s2 + $0xd8] sm:$0xff]
    %v50 = vld [vmem:[%s2 + $0xe0] sm:$0xff]
    %v51 = vld [vmem:[%s2 + $0xe8] sm:$0xff]
    %v52 = vld [vmem:[%s2 + $0xf0] sm:$0x7]
    %v53 = vld [vmem:[%s2 + $0xf8] sm:$0x7]
    %v54 = vld [vmem:[%s2 + $0x100] sm:$0x7]
    %v55 = vld [vmem:[%s2 + $0x108] sm:$0x7]
    %v56 = vld [vmem:[%s2 + $0x110] sm:$0x7]
    %v57 = vld [vmem:[%s2 + $0x118] sm:$0x7]
    %v58 = vld [vmem:[%s2 + $0x120] sm:$0xff]
    %v59 = vld [vmem:[%s2 + $0x128] sm:$0xff]
    %v60 = vld [vmem:[%s2 + $0x130] sm:$0xff]
    %v61 = vld [vmem:[%s2 + $0x138] sm:$0xff]
    %v62 = vld [vmem:[%s2 + $0x140] sm:$0xff]
    %v63 = vld [vmem:[%s2 + $0x148] sm:$0xff]
    %v64 = vld [vmem:[%s2 + $0x150] sm:$0x7]
    %v65 = vld [vmem:[%s2 + $0x158] sm:$0x7]
    %v66 = vld [vmem:[%s2 + $0x160] sm:$0x7]
    %v67 = vld [vmem:[%s2 + $0x168] sm:$0x7]
    %v68 = vld [vmem:[%s2 + $0x170] sm:$0x7]
    %v69 = vld [vmem:[%s2 + $0x178] sm:$0x7]
    %v74 = vperm.slane %v18, 0
    %v75 = vperm.slane %v18, 1
    %v76 = vperm.slane %v18, 2
    %v77 = vperm.slane %v18, 3
    %v78 = vperm.slane %v18, 4
    %v79 = vperm.slane %v18, 5
    %v80 = vperm.slane %v19, 0
    %v81 = vperm.slane %v19, 1
    %v82 = vperm.slane %v19, 2
    %v83 = vperm.slane %v19, 3
    %v84 = vperm.slane %v19, 4
    %v85 = vperm.slane %v19, 5
    %v86 = vperm.slane %v20, 0
    %v87 = vperm.slane %v20, 1
    %v88 = vperm.slane %v20, 2
    %v89 = vperm.slane %v20, 3
    %v90 = vperm.slane %v20, 4
    %v91 = vperm.slane %v20, 5
    %v92 = vperm.slane %v21, 0
    %v93 = vperm.slane %v21, 1
    %v94 = vperm.slane %v21, 2
    %v95 = vperm.slane %v21, 3
    %v96 = vperm.slane %v21, 4
    %v97 = vperm.slane %v21, 5
    %125 = vst [vmem:[#allocation1] ss:$2 sm:$0xff] %v15
    %s126 = scalar_lea.vmem [#allocation1], 16
    %127 = vst [vmem:[%s126] ss:$2 sm:$0xff] %v16
    %s128 = scalar_lea.vmem [#allocation1], 32
    %129 = vst [vmem:[%s128] ss:$2 sm:$0xff] %v17
    %v130 = vld.sshfl [vmem:[#allocation1] sm:$0xff pattern:$0x75316420]
    %v131 = vld.sshfl [vmem:[#allocation1 + $0x8] sm:$0xff pattern:$0x75316420]
    %v132 = vld.sshfl [vmem:[#allocation1 + $0x10] sm:$0xff pattern:$0x75316420]
    %v133 = vld.sshfl [vmem:[#allocation1 + $0x18] sm:$0xff pattern:$0x75316420]
    %v134 = vld.sshfl [vmem:[#allocation1 + $0x20] sm:$0xff pattern:$0x75316420]
    %v135 = vld.sshfl [vmem:[#allocation1 + $0x28] sm:$0xff pattern:$0x75316420]
    %s136 = scalar_lea.vmem [#allocation1], 48
    %137 = vst [vmem:[%s136] ss:$2 sm:$0xff] %v15
    %v138 = vld.sshfl [vmem:[#allocation1 + $0x30] sm:$0xff pattern:$0x75316420]
    %v139 = vld.sshfl [vmem:[#allocation1 + $0x38] sm:$0xff pattern:$0x75316420]
    %140 = vst [vmem:[#allocation1] ss:$2 sm:$0xff] %v16
    %141 = vst [vmem:[%s126] ss:$2 sm:$0xff] %v17
    %v142 = vld.sshfl [vmem:[#allocation1] sm:$0xff pattern:$0x75316420]
    %v143 = vld.sshfl [vmem:[#allocation1 + $0x8] sm:$0xff pattern:$0x75316420]
    %v144 = vld.sshfl [vmem:[#allocation1 + $0x10] sm:$0xff pattern:$0x75316420]
    %v145 = vld.sshfl [vmem:[#allocation1 + $0x18] sm:$0xff pattern:$0x75316420]
    %146 = vst [vmem:[%s128] ss:$2 sm:$0xff] %v15
    %147 = vst [vmem:[%s136] ss:$2 sm:$0xff] %v16
    %v148 = vld.sshfl [vmem:[#allocation1 + $0x20] sm:$0xff pattern:$0x75316420]
    %v149 = vld.sshfl [vmem:[#allocation1 + $0x28] sm:$0xff pattern:$0x75316420]
    %v150 = vld.sshfl [vmem:[#allocation1 + $0x30] sm:$0xff pattern:$0x75316420]
    %v151 = vld.sshfl [vmem:[#allocation1 + $0x38] sm:$0xff pattern:$0x75316420]
    %152 = vst [vmem:[#allocation1] ss:$2 sm:$0xff] %v17
    %v153 = vld.sshfl [vmem:[#allocation1] sm:$0xff pattern:$0x75316420]
    %v154 = vld.sshfl [vmem:[#allocation1 + $0x8] sm:$0xff pattern:$0x75316420]
    %155 = vst [vmem:[%s126] ss:$2 sm:$0xff] %v15
    %156 = vst [vmem:[%s128] ss:$2 sm:$0xff] %v16
    %157 = vst [vmem:[%s136] ss:$2 sm:$0xff] %v17
    %v158 = vld.sshfl [vmem:[#allocation1 + $0x10] sm:$0xff pattern:$0x75316420]
    %v159 = vld.sshfl [vmem:[#allocation1 + $0x18] sm:$0xff pattern:$0x75316420]
    %v160 = vld.sshfl [vmem:[#allocation1 + $0x20] sm:$0xff pattern:$0x75316420]
    %v161 = vld.sshfl [vmem:[#allocation1 + $0x28] sm:$0xff pattern:$0x75316420]
    %v162 = vld.sshfl [vmem:[#allocation1 + $0x30] sm:$0xff pattern:$0x75316420]
    %v163 = vld.sshfl [vmem:[#allocation1 + $0x38] sm:$0xff pattern:$0x75316420]
    %v164 = vrot.slane %v130, 7
    %v165 = vrot.slane %v131, 7
    %v166 = vrot.slane %v132, 7
    %v167 = vrot.slane %v133, 7
    %v168 = vrot.slane %v134, 7
    %v169 = vrot.slane %v135, 7
    %v170 = vrot.slane %v138, 7
    %v171 = vrot.slane %v139, 7
    %v172 = vrot.slane %v142, 7
    %v173 = vrot.slane %v143, 7
    %v174 = vrot.slane %v144, 7
    %v175 = vrot.slane %v145, 7
    %v176 = vrot.slane %v148, 7
    %v177 = vrot.slane %v149, 7
    %v178 = vrot.slane %v150, 7
    %v179 = vrot.slane %v151, 7
    %v180 = vrot.slane %v153, 7
    %v181 = vrot.slane %v154, 7
    %v182 = vrot.slane %v158, 7
    %v183 = vrot.slane %v159, 7
    %v184 = vrot.slane %v160, 7
    %v185 = vrot.slane %v161, 7
    %v186 = vrot.slane %v162, 7
    %v187 = vrot.slane %v163, 7
    %vm260 = vcmask 1044480
    %v261 = vrot.slane %v22, 3
    %v262 = vrot.slane %v23, 3
    %v263 = vrot.slane %v24, 3
    %v264 = vrot.slane %v25, 3
    %v265 = vrot.slane %v26, 3
    %v266 = vrot.slane %v27, 3
    %v267 = vrot.slane %v28, 3
    %v268 = vsel %vm260, %v261, %v267
    %v269 = vrot.slane %v29, 3
    %v270 = vsel %vm260, %v262, %v269
    %v271 = vrot.slane %v30, 3
    %v272 = vsel %vm260, %v263, %v271
    %v273 = vrot.slane %v31, 3
    %v274 = vsel %vm260, %v264, %v273
    %v275 = vrot.slane %v32, 3
    %v276 = vsel %vm260, %v265, %v275
    %v277 = vrot.slane %v33, 3
    %v278 = vsel %vm260, %v266, %v277
    %v279 = vrot.slane %v34, 3
    %v280 = vrot.slane %v35, 3
    %v281 = vrot.slane %v36, 3
    %v282 = vrot.slane %v37, 3
    %v283 = vrot.slane %v38, 3
    %v284 = vrot.slane %v39, 3
    %v285 = vrot.slane %v40, 3
    %v286 = vsel %vm260, %v279, %v285
    %v287 = vrot.slane %v41, 3
    %v288 = vsel %vm260, %v280, %v287
    %v289 = vrot.slane %v42, 3
    %v290 = vsel %vm260, %v281, %v289
    %v291 = vrot.slane %v43, 3
    %v292 = vsel %vm260, %v282, %v291
    %v293 = vrot.slane %v44, 3
    %v294 = vsel %vm260, %v283, %v293
    %v295 = vrot.slane %v45, 3
    %v296 = vsel %vm260, %v284, %v295
    %v297 = vrot.slane %v46, 3
    %v298 = vrot.slane %v47, 3
    %v299 = vrot.slane %v48, 3
    %v300 = vrot.slane %v49, 3
    %v301 = vrot.slane %v50, 3
    %v302 = vrot.slane %v51, 3
    %v303 = vrot.slane %v52, 3
    %v304 = vsel %vm260, %v297, %v303
    %v305 = vrot.slane %v53, 3
    %v306 = vsel %vm260, %v298, %v305
    %v307 = vrot.slane %v54, 3
    %v308 = vsel %vm260, %v299, %v307
    %v309 = vrot.slane %v55, 3
    %v310 = vsel %vm260, %v300, %v309
    %v311 = vrot.slane %v56, 3
    %v312 = vsel %vm260, %v301, %v311
    %v313 = vrot.slane %v57, 3
    %v314 = vsel %vm260, %v302, %v313
    %v315 = vrot.slane %v58, 3
    %v316 = vrot.slane %v59, 3
    %v317 = vrot.slane %v60, 3
    %v318 = vrot.slane %v61, 3
    %v319 = vrot.slane %v62, 3
    %v320 = vrot.slane %v63, 3
    %v321 = vrot.slane %v64, 3
    %v322 = vsel %vm260, %v315, %v321
    %v323 = vrot.slane %v65, 3
    %v324 = vsel %vm260, %v316, %v323
    %v325 = vrot.slane %v66, 3
    %v326 = vsel %vm260, %v317, %v325
    %v327 = vrot.slane %v67, 3
    %v328 = vsel %vm260, %v318, %v327
    %v329 = vrot.slane %v68, 3
    %v330 = vsel %vm260, %v319, %v329
    %v331 = vrot.slane %v69, 3
    %v332 = vsel %vm260, %v320, %v331
    %vm381 = vcmask 1040384
    %v382 = vsel %vm381, %v74, %v164
    %v383 = vsel %vm381, %v75, %v165
    %v384 = vsel %vm381, %v76, %v166
    %v385 = vsel %vm381, %v77, %v167
    %v386 = vsel %vm381, %v78, %v168
    %v387 = vsel %vm381, %v79, %v169
    %v388 = vsel %vm381, %v80, %v170
    %v389 = vsel %vm381, %v81, %v171
    %v390 = vsel %vm381, %v82, %v172
    %v391 = vsel %vm381, %v83, %v173
    %v392 = vsel %vm381, %v84, %v174
    %v393 = vsel %vm381, %v85, %v175
    %v394 = vsel %vm381, %v86, %v176
    %v395 = vsel %vm381, %v87, %v177
    %v396 = vsel %vm381, %v88, %v178
    %v397 = vsel %vm381, %v89, %v179
    %v398 = vsel %vm381, %v90, %v180
    %v399 = vsel %vm381, %v91, %v181
    %v400 = vsel %vm381, %v92, %v182
    %v401 = vsel %vm381, %v93, %v183
    %v402 = vsel %vm381, %v94, %v184
    %v403 = vsel %vm381, %v95, %v185
    %v404 = vsel %vm381, %v96, %v186
    %v405 = vsel %vm381, %v97, %v187
    %v406 = vsel %vm260, %v382, %v261
    %v407 = vsel %vm260, %v383, %v262
    %v408 = vsel %vm260, %v384, %v263
    %v409 = vsel %vm260, %v385, %v264
    %v410 = vsel %vm260, %v386, %v265
    %v411 = vsel %vm260, %v387, %v266
    %v412 = vsel %vm260, %v388, %v279
    %v413 = vsel %vm260, %v389, %v280
    %v414 = vsel %vm260, %v390, %v281
    %v415 = vsel %vm260, %v391, %v282
    %v416 = vsel %vm260, %v392, %v283
    %v417 = vsel %vm260, %v393, %v284
    %v418 = vsel %vm260, %v394, %v297
    %v419 = vsel %vm260, %v395, %v298
    %v420 = vsel %vm260, %v396, %v299
    %v421 = vsel %vm260, %v397, %v300
    %v422 = vsel %vm260, %v398, %v301
    %v423 = vsel %vm260, %v399, %v302
    %v424 = vsel %vm260, %v400, %v315
    %v425 = vsel %vm260, %v401, %v316
    %v426 = vsel %vm260, %v402, %v317
    %v427 = vsel %vm260, %v403, %v318
    %v428 = vsel %vm260, %v404, %v319
    %v429 = vsel %vm260, %v405, %v320
    %430 = vst [vmem:[#allocation2] sm:$0xff] %v406
    %431 = vst [vmem:[#allocation2 + $0x8] sm:$0xff] %v407
    %432 = vst [vmem:[#allocation2 + $0x10] sm:$0xff] %v408
    %433 = vst [vmem:[#allocation2 + $0x18] sm:$0xff] %v409
    %434 = vst [vmem:[#allocation2 + $0x20] sm:$0xff] %v410
    %435 = vst [vmem:[#allocation2 + $0x28] sm:$0xff] %v411
    %436 = vst [vmem:[#allocation2 + $0x30] sm:$0xff] %v268
    %437 = vst [vmem:[#allocation2 + $0x38] sm:$0xff] %v270
    %438 = vst [vmem:[#allocation2 + $0x40] sm:$0xff] %v272
    %439 = vst [vmem:[#allocation2 + $0x48] sm:$0xff] %v274
    %440 = vst [vmem:[#allocation2 + $0x50] sm:$0xff] %v276
    %441 = vst [vmem:[#allocation2 + $0x58] sm:$0xff] %v278
    %442 = vst [vmem:[#allocation2 + $0x60] sm:$0xff] %v412
    %443 = vst [vmem:[#allocation2 + $0x68] sm:$0xff] %v413
    %444 = vst [vmem:[#allocation2 + $0x70] sm:$0xff] %v414
    %445 = vst [vmem:[#allocation2 + $0x78] sm:$0xff] %v415
    %446 = vst [vmem:[#allocation2 + $0x80] sm:$0xff] %v416
    %447 = vst [vmem:[#allocation2 + $0x88] sm:$0xff] %v417
    %448 = vst [vmem:[#allocation2 + $0x90] sm:$0xff] %v286
    %449 = vst [vmem:[#allocation2 + $0x98] sm:$0xff] %v288
    %450 = vst [vmem:[#allocation2 + $0xa0] sm:$0xff] %v290
    %451 = vst [vmem:[#allocation2 + $0xa8] sm:$0xff] %v292
    %452 = vst [vmem:[#allocation2 + $0xb0] sm:$0xff] %v294
    %453 = vst [vmem:[#allocation2 + $0xb8] sm:$0xff] %v296
    %454 = vst [vmem:[#allocation2 + $0xc0] sm:$0xff] %v418
    %455 = vst [vmem:[#allocation2 + $0xc8] sm:$0xff] %v419
    %456 = vst [vmem:[#allocation2 + $0xd0] sm:$0xff] %v420
    %457 = vst [vmem:[#allocation2 + $0xd8] sm:$0xff] %v421
    %458 = vst [vmem:[#allocation2 + $0xe0] sm:$0xff] %v422
    %459 = vst [vmem:[#allocation2 + $0xe8] sm:$0xff] %v423
    %460 = vst [vmem:[#allocation2 + $0xf0] sm:$0xff] %v304
    %461 = vst [vmem:[#allocation2 + $0xf8] sm:$0xff] %v306
    %462 = vst [vmem:[#allocation2 + $0x100] sm:$0xff] %v308
    %463 = vst [vmem:[#allocation2 + $0x108] sm:$0xff] %v310
    %464 = vst [vmem:[#allocation2 + $0x110] sm:$0xff] %v312
    %465 = vst [vmem:[#allocation2 + $0x118] sm:$0xff] %v314
    %466 = vst [vmem:[#allocation2 + $0x120] sm:$0xff] %v424
    %467 = vst [vmem:[#allocation2 + $0x128] sm:$0xff] %v425
    %468 = vst [vmem:[#allocation2 + $0x130] sm:$0xff] %v426
    %469 = vst [vmem:[#allocation2 + $0x138] sm:$0xff] %v427
    %470 = vst [vmem:[#allocation2 + $0x140] sm:$0xff] %v428
    %471 = vst [vmem:[#allocation2 + $0x148] sm:$0xff] %v429
    %472 = vst [vmem:[#allocation2 + $0x150] sm:$0xff] %v322
    %473 = vst [vmem:[#allocation2 + $0x158] sm:$0xff] %v324
    %474 = vst [vmem:[#allocation2 + $0x160] sm:$0xff] %v326
    %475 = vst [vmem:[#allocation2 + $0x168] sm:$0xff] %v328
    %476 = vst [vmem:[#allocation2 + $0x170] sm:$0xff] %v330
    %477 = vst [vmem:[#allocation2 + $0x178] sm:$0xff] %v332
    // Predicated region
    $region14: #{tpu_custom_call.1} parent=1 // pred_check
      _
    $region15: #{tpu_custom_call.1} parent=1 // pred_check_branch
      %479 = sbr.rel (0) target = $region17
    $region16: #{tpu_custom_call.1} parent=1 // pred_region
      %481 = vsyncadd [#allocation3], 0
      %s482 = sshll.u32 [#allocation2], 4
      %s483 = int_to_ptr.vmem [resolvable:$true] %s482
      %s484 = sshll.u32 %s3, 4
      %s485 = int_to_ptr.hbm [resolvable:$true] %s484
      %490 = dma.vmem_to_hbm [thread:$0]  %s483, 6144, %s485, [#allocation3], 768, 768, 48
    $region17: #{tpu_custom_call.1} parent=1 // pred_fallthru
      _
    // Predicated region
    $region18: #{tpu_custom_call.1} parent=1 // pred_check
      _
    $region19: #{tpu_custom_call.1} parent=1 // pred_check_branch
      %492 = sbr.rel (0) target = $region21
    $region20: #{tpu_custom_call.1} parent=1 // pred_region
      %494 = dma.done [#allocation3], 6144
    $region21: #{tpu_custom_call.1} parent=1 // pred_fallthru
      _
    %495 = vsyncpa [#allocation3], 1

</llo_original>
